<compile_context>
chip_gen: v7x
topology: tpu7x:2x2x1
jax: 0.10.0
libtpu: 0.0.40
codegen_flags: <defaults>
</compile_context>

<pallas_src>
import functools

import jax
import jax.numpy as jnp
from jax import lax
from jax.experimental import pallas as pl
from jax.experimental.pallas import tpu as pltpu


def _sgcn_kernel(x_ref, adj_ref, mix_ref, bias_ref, o_ref, *, hop_alpha, gcn_depth):
    """Mix-hop propagation + 1x1-conv channel mix on a lane-dense (N, B*C*L) slab.

    x_ref    : (N, B*C*L)               input slab, column order (b, c, l)
    adj_ref  : (N, N)                   learned adjacency
    mix_ref  : (gcn_depth+1, B*C*L, B*C_out*L)  per-hop column-mixing matrices
    bias_ref : (1, B*C_out*L)           per-output-column bias
    o_ref    : (N, B*C_out*L)           output slab, column order (b, oc, l)
    """
    f32 = jnp.float32
    n = adj_ref.shape[0]

    # adj + I, row-normalized (reciprocal on the EUP, not a VPU divide).
    rows = lax.broadcasted_iota(jnp.int32, (n, n), 0)
    cols = lax.broadcasted_iota(jnp.int32, (n, n), 1)
    a = adj_ref[...] + (rows == cols).astype(f32)
    a = a * pl.reciprocal(jnp.sum(a, axis=1, keepdims=True), approx=True)

    x = x_ref[...]
    ax = hop_alpha * x                      # hoisted out of the hop loop
    one_m_alpha = 1.0 - hop_alpha

    # Hop 0 contribution, then accumulate each subsequent hop as it is produced.
    h = x
    acc = jnp.dot(h, mix_ref[0], preferred_element_type=f32)
    for d in range(1, gcn_depth + 1):       # static unroll (gcn_depth is tiny)
        h = ax + one_m_alpha * jnp.dot(a, h, preferred_element_type=f32)
        acc = acc + jnp.dot(h, mix_ref[d], preferred_element_type=f32)

    # One unmasked lane-dense store.
    o_ref[...] = acc + bias_ref[...]


def multilevel_wave_gcn_forward(wave_feature, adj, mlp_weight, mlp_bias, *,
                                gcn_depth, hop_alpha):
    """wave_feature: (B, C, N, L); adj: (N, N); mlp_weight: (C_out, (gcn_depth+1)*C)."""
    b, c, n, l = wave_feature.shape
    c_out = mlp_weight.shape[0]
    f32 = jnp.float32

    # Lane-dense input slab: (N, B*C*L), column order (b, c, l). One-time wrapper op.
    x_slab = wave_feature.astype(f32).transpose(2, 0, 1, 3).reshape(n, b * c * l)

    # Pre-expand the 1x1-conv weight into per-hop column-mixing matrices (built once,
    # outside the hot path):  mix[d, (b,ci,l), (b',oc,l')] = W[oc, d*C+ci] * I[b,b'] * I[l,l'].
    w_dc = mlp_weight.astype(f32).reshape(c_out, gcn_depth + 1, c)      # [oc, d, ci]
    mix = jnp.einsum('odc,bB,lL->dbclBoL', w_dc,
                     jnp.eye(b, dtype=f32), jnp.eye(l, dtype=f32))
    mix = mix.reshape(gcn_depth + 1, b * c * l, b * c_out * l)

    # Per-output-column bias, column order (b, oc, l).
    bias_row = jnp.tile(jnp.repeat(mlp_bias.astype(f32), l), b).reshape(1, b * c_out * l)

    vmem = pl.BlockSpec(memory_space=pltpu.MemorySpace.VMEM)
    out_slab = pl.pallas_call(
        functools.partial(_sgcn_kernel, hop_alpha=hop_alpha, gcn_depth=gcn_depth),
        out_shape=jax.ShapeDtypeStruct((n, b * c_out * l), jnp.float32),
        in_specs=[vmem, vmem, vmem, vmem],
        out_specs=vmem,
    )(x_slab, adj.astype(f32), mix, bias_row)

    # (N, B*C_out*L) -> (B, C_out, N, L)
    return out_slab.reshape(n, b, c_out, l).transpose(1, 2, 0, 3)


def _sgcn_reference(wave_feature, adj, mlp_weight, mlp_bias, *, gcn_depth, hop_alpha):
    """Pure-JAX reference of the PyTorch sgcn forward (train-agnostic)."""
    f32 = jnp.float32
    x = wave_feature.astype(f32)
    n = adj.shape[0]
    a = adj.astype(f32) + jnp.eye(n, dtype=f32)
    a = a / jnp.sum(a, axis=1, keepdims=True)
    h = x
    outs = [h]
    for _ in range(gcn_depth):
        h = hop_alpha * x + (1.0 - hop_alpha) * jnp.einsum('bcwl,vw->bcvl', h, a)
        outs.append(h)
    ho = jnp.concatenate(outs, axis=1)                       # (B, (D+1)*C, N, L)
    out = jnp.einsum('ok,bknl->bonl', mlp_weight.astype(f32), ho)
    return out + mlp_bias.astype(f32)[None, :, None, None]


if __name__ == "__main__":
    # Small shapes consistent with the module (input_channel=8, gcn_depth=1, alpha=0.05).
    batch = 2
    in_channels = 8
    node_size = 16
    seq_len = 8
    gcn_depth = 1
    hop_alpha = 0.05

    key = jax.random.PRNGKey(0)
    k_wave, k_adj, k_w, k_b = jax.random.split(key, 4)

    wave_feature = jax.random.normal(
        k_wave, (batch, in_channels, node_size, seq_len), dtype=jnp.float32)
    # Non-negative adjacency (as produced by the WaveForM graph learner: relu(tanh(...))).
    adj = jax.random.uniform(k_adj, (node_size, node_size), dtype=jnp.float32)
    mlp_weight = (jax.random.normal(
        k_w, (in_channels, (gcn_depth + 1) * in_channels)) * 0.1).astype(jnp.float32)
    mlp_bias = (jax.random.normal(k_b, (in_channels,)) * 0.01).astype(jnp.float32)

    gc_output = multilevel_wave_gcn_forward(
        wave_feature, adj, mlp_weight, mlp_bias,
        gcn_depth=gcn_depth, hop_alpha=hop_alpha)
    gc_output = jax.block_until_ready(gc_output)

    ref = _sgcn_reference(wave_feature, adj, mlp_weight, mlp_bias,
                          gcn_depth=gcn_depth, hop_alpha=hop_alpha)

    assert gc_output.shape == (batch, in_channels, node_size, seq_len)
    assert bool(jnp.all(jnp.isfinite(gc_output)))
    # EUP approximate reciprocal in the row-normalization -> generous tolerance.
    assert bool(jnp.allclose(gc_output, ref, rtol=2e-2, atol=2e-2))
    print("KERNEL_OK")
</pallas_src>

<mosaic_0001>
module attributes {stable_mosaic.version = 11 : i64} {
  func.func @_sgcn_kernel(%arg0: memref<16x128xf32, #tpu.memory_space<vmem>>, %arg1: memref<16x16xf32, #tpu.memory_space<vmem>>, %arg2: memref<2x128x128xf32, #tpu.memory_space<vmem>>, %arg3: memref<1x128xf32, #tpu.memory_space<vmem>>, %arg4: memref<16x128xf32, #tpu.memory_space<vmem>>) attributes {dimension_semantics = [], scalar_prefetch = 0 : i64, scratch_operands = 0 : i64, tpu.core_type = #tpu.core_type<tc>} {
    %0 = tpu.iota {dimensions = array<i32: 0>} : vector<16x16xi32>
    %1 = tpu.iota {dimensions = array<i32: 1>} : vector<16x16xi32>
    %c0 = arith.constant 0 : index
    %c0_0 = arith.constant 0 : index
    %2 = vector.load %arg1[%c0, %c0_0] : memref<16x16xf32, #tpu.memory_space<vmem>>, vector<16x16xf32>
    %3 = arith.cmpi eq, %0, %1 : vector<16x16xi32>
    %4 = arith.extui %3 : vector<16x16xi1> to vector<16x16xi32>
    %5 = arith.sitofp %4 : vector<16x16xi32> to vector<16x16xf32>
    %6 = arith.addf %2, %5 : vector<16x16xf32>
    %cst = arith.constant dense<0.000000e+00> : vector<16xf32>
    %7 = vector.multi_reduction <add>, %6, %cst [1] : vector<16x16xf32> to vector<16xf32>
    %8 = vector.shape_cast %7 : vector<16xf32> to vector<16x1xf32>
    %9 = tpu.reciprocal %8 {approx = true} : vector<16x1xf32> -> vector<16x1xf32>
    %10 = vector.broadcast %9 : vector<16x1xf32> to vector<16x16xf32>
    %11 = arith.mulf %6, %10 : vector<16x16xf32>
    %c0_1 = arith.constant 0 : index
    %c0_2 = arith.constant 0 : index
    %12 = vector.load %arg0[%c0_1, %c0_2] : memref<16x128xf32, #tpu.memory_space<vmem>>, vector<16x128xf32>
    %cst_3 = arith.constant 5.000000e-02 : f32
    %13 = vector.broadcast %cst_3 : f32 to vector<16x128xf32>
    %14 = arith.mulf %13, %12 : vector<16x128xf32>
    %c0_4 = arith.constant 0 : index
    %c0_5 = arith.constant 0 : index
    %c0_6 = arith.constant 0 : index
    %15 = vector.load %arg2[%c0_4, %c0_5, %c0_6] : memref<2x128x128xf32, #tpu.memory_space<vmem>>, vector<1x128x128xf32>
    %16 = vector.shape_cast %15 : vector<1x128x128xf32> to vector<128x128xf32>
    %cst_7 = arith.constant dense<0.000000e+00> : vector<16x128xf32>
    %17 = tpu.matmul %12, %16, %cst_7 {dimension_numbers = #tpu.dot_dimension_numbers<[1], [0], [0], [1], [0, 0, 1, 1], [], []>} : vector<16x128xf32>, vector<128x128xf32>, vector<16x128xf32> -> vector<16x128xf32>
    %cst_8 = arith.constant dense<0.000000e+00> : vector<16x128xf32>
    %18 = tpu.matmul %11, %12, %cst_8 {dimension_numbers = #tpu.dot_dimension_numbers<[1], [0], [0], [1], [0, 0, 1, 1], [], []>} : vector<16x16xf32>, vector<16x128xf32>, vector<16x128xf32> -> vector<16x128xf32>
    %cst_9 = arith.constant 0.949999988 : f32
    %19 = vector.broadcast %cst_9 : f32 to vector<16x128xf32>
    %20 = arith.mulf %19, %18 : vector<16x128xf32>
    %21 = arith.addf %14, %20 : vector<16x128xf32>
    %c1 = arith.constant 1 : index
    %c0_10 = arith.constant 0 : index
    %c0_11 = arith.constant 0 : index
    %22 = vector.load %arg2[%c1, %c0_10, %c0_11] : memref<2x128x128xf32, #tpu.memory_space<vmem>>, vector<1x128x128xf32>
    %23 = vector.shape_cast %22 : vector<1x128x128xf32> to vector<128x128xf32>
    %cst_12 = arith.constant dense<0.000000e+00> : vector<16x128xf32>
    %24 = tpu.matmul %21, %23, %cst_12 {dimension_numbers = #tpu.dot_dimension_numbers<[1], [0], [0], [1], [0, 0, 1, 1], [], []>} : vector<16x128xf32>, vector<128x128xf32>, vector<16x128xf32> -> vector<16x128xf32>
    %25 = arith.addf %17, %24 : vector<16x128xf32>
    %c0_13 = arith.constant 0 : index
    %c0_14 = arith.constant 0 : index
    %26 = vector.load %arg3[%c0_13, %c0_14] : memref<1x128xf32, #tpu.memory_space<vmem>>, vector<1x128xf32>
    %27 = vector.broadcast %26 : vector<1x128xf32> to vector<16x128xf32>
    %28 = arith.addf %25, %27 : vector<16x128xf32>
    %c0_15 = arith.constant 0 : index
    %c0_16 = arith.constant 0 : index
    %29 = vector.load %arg4[%c0_15, %c0_16] : memref<16x128xf32, #tpu.memory_space<vmem>>, vector<16x128xf32>
    tpu.vector_store %arg4[%c0_15, %c0_16], %28 {strides = array<i32>} : memref<16x128xf32, #tpu.memory_space<vmem>>, vector<16x128xf32>,
    return
  }
}

</mosaic_0001>

<llo_original>
// kernel: tpu_custom_call.1
$region0: #{tpu_custom_call.1}
  #allocation0 [shape = 'u32[]', space=smem, size = 0x4, offset = 0x4, fixed_abs, tag = 'smem constant byte address 0x4 - core index']
  #allocation1 [shape = 'u32[144,128]{1,0:T(1,128)}', space=vmem, size = 0x12000, scoped, tag = 'internal scratch']
  %s0 = inlined_call_operand.hbm [shape: f32[16,128], index: 0, kind: input, shape index: {}]
  %s1 = inlined_call_operand.hbm [shape: f32[16,16], index: 1, kind: input, shape index: {}]
  %s2 = inlined_call_operand.hbm [shape: f32[2,128,128], index: 2, kind: input, shape index: {}]
  %s3 = inlined_call_operand.vmem [shape: f32[1,128], index: 3, kind: input, shape index: {}]
  %s4 = inlined_call_operand.hbm [shape: f32[16,128], index: 4, kind: output, shape index: {}]
  %s5 = sld [smem:[#allocation0]]
  $region38: #{tpu_custom_call.1} parent=0
    _
  %s7 = ssub.s32 1, %s5
  %s8 = scalar_select 0, %s7, %s5
  $region1: #{tpu_custom_call.1} parent=0
    #allocation2 [shape = 'u8[8192]{0}', space=vmem, size = 0x2000, scoped, tag = 'input window, operand 0, single buffered']
    #allocation3 [shape = 's32[1]{0}', space=sflag, size = 0x4, scoped, tag = 'scoped memory for tpu_custom_call.1']
    #allocation4 [shape = 's32[1]{0}', space=sflag, size = 0x4, scoped, tag = 'scoped memory for tpu_custom_call.1']
    #allocation5 [shape = 'u8[8192]{0}', space=vmem, size = 0x2000, scoped, tag = 'input window, operand 1, single buffered']
    #allocation6 [shape = 's32[1]{0}', space=sflag, size = 0x4, scoped, tag = 'scoped memory for tpu_custom_call.1']
    #allocation7 [shape = 'u8[131072]{0}', space=vmem, size = 0x20000, scoped, tag = 'input window, operand 2, single buffered']
    #allocation8 [shape = 'u8[8192]{0}', space=vmem, size = 0x2000, scoped, tag = 'output window, operand 0, single buffered']
    %9 = vsyncpa [#allocation3], 0
    %10 = vsyncpa [#allocation6], 0
    %11 = vsyncpa [#allocation4], 0
    // Predicated region
    $region2: #{tpu_custom_call.1} parent=1 // pred_check
      _
    $region3: #{tpu_custom_call.1} parent=1 // pred_check_branch
      %13 = sbr.rel (0) target = $region5
    $region4: #{tpu_custom_call.1} parent=1 // pred_region
      %s15 = ssub.s32 256, 256
      %16 = vsyncadd [#allocation3], %s15
      %s17 = sshll.u32 [#allocation2], 4
      %s18 = int_to_ptr.vmem [resolvable:$true] %s17
      %23 = dma.hbm_to_vmem [thread:$0]  %s0, 256, %s18, [#allocation3], 128, 128, 8
    $region5: #{tpu_custom_call.1} parent=1 // pred_fallthru
      _
    // Predicated region
    $region6: #{tpu_custom_call.1} parent=1 // pred_check
      _
    $region7: #{tpu_custom_call.1} parent=1 // pred_check_branch
      %25 = sbr.rel (0) target = $region9
    $region8: #{tpu_custom_call.1} parent=1 // pred_region
      %s27 = ssub.s32 256, 256
      %28 = vsyncadd [#allocation6], %s27
      %s29 = sshll.u32 [#allocation5], 4
      %s30 = int_to_ptr.vmem [resolvable:$true] %s29
      %35 = dma.hbm_to_vmem [thread:$0]  %s1, 256, %s30, [#allocation6], 128, 128, 8
    $region9: #{tpu_custom_call.1} parent=1 // pred_fallthru
      _
    // Predicated region
    $region10: #{tpu_custom_call.1} parent=1 // pred_check
      _
    $region11: #{tpu_custom_call.1} parent=1 // pred_check_branch
      %37 = sbr.rel (0) target = $region13
    $region12: #{tpu_custom_call.1} parent=1 // pred_region
      %s39 = ssub.s32 4096, 4096
      %40 = vsyncadd [#allocation6], %s39
      %s41 = sshll.u32 [#allocation7], 4
      %s42 = int_to_ptr.vmem [resolvable:$true] %s41
      %47 = dma.hbm_to_vmem [thread:$0]  %s2, 4096, %s42, [#allocation6], 128, 128, 8
    $region13: #{tpu_custom_call.1} parent=1 // pred_fallthru
      _
    // Predicated region
    $region14: #{tpu_custom_call.1} parent=1 // pred_check
      _
    $region15: #{tpu_custom_call.1} parent=1 // pred_check_branch
      %49 = sbr.rel (0) target = $region17
    $region16: #{tpu_custom_call.1} parent=1 // pred_region
      _
    $region17: #{tpu_custom_call.1} parent=1 // pred_fallthru
      _
    // Predicated region
    $region18: #{tpu_custom_call.1} parent=1 // pred_check
      _
    $region19: #{tpu_custom_call.1} parent=1 // pred_check_branch
      %51 = sbr.rel (0) target = $region21
    $region20: #{tpu_custom_call.1} parent=1 // pred_region
      %52 = dma.done [#allocation3], 256
    $region21: #{tpu_custom_call.1} parent=1 // pred_fallthru
      _
    // Predicated region
    $region22: #{tpu_custom_call.1} parent=1 // pred_check
      _
    $region23: #{tpu_custom_call.1} parent=1 // pred_check_branch
      %54 = sbr.rel (0) target = $region25
    $region24: #{tpu_custom_call.1} parent=1 // pred_region
      %55 = dma.done [#allocation6], 256
    $region25: #{tpu_custom_call.1} parent=1 // pred_fallthru
      _
    // Predicated region
    $region26: #{tpu_custom_call.1} parent=1 // pred_check
      _
    $region27: #{tpu_custom_call.1} parent=1 // pred_check_branch
      %57 = sbr.rel (0) target = $region29
    $region28: #{tpu_custom_call.1} parent=1 // pred_region
      %58 = dma.done [#allocation6], 4096
    $region29: #{tpu_custom_call.1} parent=1 // pred_fallthru
      _
    %v59 = vlaneseq
    %v60 = vshrl.u32 %v59, 7
    %v61 = vadd.s32 %v60, 8
    %v62 = vlaneseq
    %v63 = vand.u32 %v62, 127
    %v64 = vld [vmem:[#allocation5] sm:$0xff]
    %v65 = vld [vmem:[#allocation5 + $0x8] sm:$0xff]
    %vm66 = vcmp.eq.s32.totalorder %v60, %v63
    %vm67 = vcmp.eq.s32.totalorder %v61, %v63
    %v68 = vsel %vm66, 1, 0
    %v69 = vsel %vm67, 1, 0
    %v70 = vcvt.s32.f32 %v68
    %v71 = vcvt.s32.f32 %v69
    %v72 = vadd.f32 %v64, %v70
    %v73 = vadd.f32 %v65, %v71
    %vm74 = vcmask 130048
    %v75 = vsel %vm74, %v72, 0.0
    %76 = vadd.xlane.f32.xlu0 %v75
    %v77 = vpop.xlane.xlu0 %76
    %v78 = vsel %vm74, %v73, 0.0
    %79 = vadd.xlane.f32.xlu0 %v78
    %v80 = vpop.xlane.xlu0 %79
    %v81 = vrcp.pop %v77
    %v82 = vrcp.pop %v80
    %v83 = vmul.f32 %v72, %v81
    %v84 = vmul.f32 %v73, %v82
    %v85 = vld [vmem:[#allocation2] sm:$0xff]
    %v86 = vld [vmem:[#allocation2 + $0x8] sm:$0xff]
    %v87 = vmul.f32 %v85, 0.05
    %v88 = vmul.f32 %v86, 0.05
    %v89 = vld [vmem:[#allocation7] sm:$0xff]
    %v90 = vld [vmem:[#allocation7 + $0x8] sm:$0xff]
    %v91 = vld [vmem:[#allocation7 + $0x10] sm:$0xff]
    %v92 = vld [vmem:[#allocation7 + $0x18] sm:$0xff]
    %v93 = vld [vmem:[#allocation7 + $0x20] sm:$0xff]
    %v94 = vld [vmem:[#allocation7 + $0x28] sm:$0xff]
    %v95 = vld [vmem:[#allocation7 + $0x30] sm:$0xff]
    %v96 = vld [vmem:[#allocation7 + $0x38] sm:$0xff]
    %v97 = vld [vmem:[#allocation7 + $0x40] sm:$0xff]
    %v98 = vld [vmem:[#allocation7 + $0x48] sm:$0xff]
    %v99 = vld [vmem:[#allocation7 + $0x50] sm:$0xff]
    %v100 = vld [vmem:[#allocation7 + $0x58] sm:$0xff]
    %v101 = vld [vmem:[#allocation7 + $0x60] sm:$0xff]
    %v102 = vld [vmem:[#allocation7 + $0x68] sm:$0xff]
    %v103 = vld [vmem:[#allocation7 + $0x70] sm:$0xff]
    %v104 = vld [vmem:[#allocation7 + $0x78] sm:$0xff]
    %v106 = vsel %vm74, %v83, 0
    %v109 = vsel %vm74, %v84, 0
    %111 = vmatprep.subr.mxu0 0.0
    %112 = vmatpush1.msra.mxu0 %v85
    %113 = vmatprep.subr.mxu0 0.0
    %114 = vmatpush1.msra.mxu0 %v86
    %115 = vmatprep.subr.mxu0 0.0
    %116 = vmatpush1.msra.mxu0 0.0
    %117 = vmatprep.subr.mxu0 0.0
    %118 = vmatpush1.msra.mxu0 0.0
    %119 = vmatprep.subr.mxu0 0.0
    %120 = vmatpush1.msra.mxu0 0.0
    %121 = vmatprep.subr.mxu0 0.0
    %122 = vmatpush1.msra.mxu0 0.0
    %123 = vmatprep.subr.mxu0 0.0
    %124 = vmatpush1.msra.mxu0 0.0
    %125 = vmatprep.subr.mxu0 0.0
    %126 = vmatpush1.msra.mxu0 0.0
    %127 = vmatprep.subr.mxu0 0.0
    %128 = vmatpush1.msra.mxu0 0.0
    %129 = vmatprep.subr.mxu0 0.0
    %130 = vmatpush1.msra.mxu0 0.0
    %131 = vmatprep.subr.mxu0 0.0
    %132 = vmatpush1.msra.mxu0 0.0
    %133 = vmatprep.subr.mxu0 0.0
    %134 = vmatpush1.msra.mxu0 0.0
    %135 = vmatprep.subr.mxu0 0.0
    %136 = vmatpush1.msra.mxu0 0.0
    %137 = vmatprep.subr.mxu0 0.0
    %138 = vmatpush1.msra.mxu0 0.0
    %139 = vmatprep.subr.mxu0 0.0
    %140 = vmatpush1.msra.mxu0 0.0
    %141 = vmatprep.subr.mxu0 0.0
    %142 = vmatpush1.msra.mxu0 0.0
    %143 = vmatprep.subr.mxu0 0.0
    %144 = vmatpush1.msra.mxu0 0.0
    %145 = vmatprep.subr.mxu0 0.0
    %146 = vmatpush1.msra.mxu0 0.0
    %147 = vmatprep.subr.mxu0 0.0
    %148 = vmatpush1.msra.mxu0 0.0
    %149 = vmatprep.subr.mxu0 0.0
    %150 = vmatpush1.msra.mxu0 0.0
    %151 = vmatprep.subr.mxu0 0.0
    %152 = vmatpush1.msra.mxu0 0.0
    %153 = vmatprep.subr.mxu0 0.0
    %154 = vmatpush1.msra.mxu0 0.0
    %155 = vmatprep.subr.mxu0 0.0
    %156 = vmatpush1.msra.mxu0 0.0
    %157 = vmatprep.subr.mxu0 0.0
    %158 = vmatpush1.msra.mxu0 0.0
    %159 = vmatprep.subr.mxu0 0.0
    %160 = vmatpush1.msra.mxu0 0.0
    %161 = vmatprep.subr.mxu0 0.0
    %162 = vmatpush1.msra.mxu0 0.0
    %163 = vmatprep.subr.mxu0 0.0
    %164 = vmatpush1.msra.mxu0 0.0
    %165 = vmatprep.subr.mxu0 0.0
    %166 = vmatpush1.msra.mxu0 0.0
    %167 = vmatprep.subr.mxu0 0.0
    %168 = vmatpush1.msra.mxu0 0.0
    %169 = vmatprep.subr.mxu0 0.0
    %170 = vmatpush1.msra.mxu0 0.0
    %171 = vmatprep.subr.mxu0 0.0
    %172 = vmatpush1.msra.mxu0 0.0
    %173 = vmatprep.subr.mxu0 0.0
    %174 = vmatpush1.msra.mxu0 0.0
    %175 = vmatprep.mubr.f32.mxu0 0.0
    %176 = vmatmul.mubr.f32.gmra.mrb[0].mxu0 %v106
    %v177 = vpop.f32.mrb[0].mxu0
    %v178 = vadd.f32 0.0, %v177
    %v179 = vpop.f32.mrb[0].mxu0
    %180 = vmatprep.mubr.f32.mxu0 0.0
    %181 = vmatmul.mubr.f32.gmra.mrb[0].mxu0 %v109
    %v182 = vpop.f32.mrb[0].mxu0
    %v183 = vadd.f32 0.0, %v182
    %v184 = vpop.f32.mrb[0].mxu0
    %185 = vdwg.mxu0
    %v186 = vmul.f32 %v178, 0.95
    %v187 = vmul.f32 %v183, 0.95
    %v188 = vadd.f32 %v87, %v186
    %v189 = vadd.f32 %v88, %v187
    %s190 = scalar_lea.vmem [#allocation7], 128
    %v191 = vld [vmem:[%s190] sm:$0xff]
    %v192 = vld [vmem:[%s190 + $0x8] sm:$0xff]
    %v193 = vld [vmem:[%s190 + $0x10] sm:$0xff]
    %v194 = vld [vmem:[%s190 + $0x18] sm:$0xff]
    %v195 = vld [vmem:[%s190 + $0x20] sm:$0xff]
    %v196 = vld [vmem:[%s190 + $0x28] sm:$0xff]
    %v197 = vld [vmem:[%s190 + $0x30] sm:$0xff]
    %v198 = vld [vmem:[%s190 + $0x38] sm:$0xff]
    %v199 = vld [vmem:[%s190 + $0x40] sm:$0xff]
    %v200 = vld [vmem:[%s190 + $0x48] sm:$0xff]
    %v201 = vld [vmem:[%s190 + $0x50] sm:$0xff]
    %v202 = vld [vmem:[%s190 + $0x58] sm:$0xff]
    %v203 = vld [vmem:[%s190 + $0x60] sm:$0xff]
    %v204 = vld [vmem:[%s190 + $0x68] sm:$0xff]
    %v205 = vld [vmem:[%s190 + $0x70] sm:$0xff]
    %v206 = vld [vmem:[%s190 + $0x78] sm:$0xff]
    %207 = vmatprep.subr.mxu0 0.0
    %208 = vmatpush1.msra.mxu0 %v191
    %209 = vmatprep.subr.mxu0 0.0
    %210 = vmatpush1.msra.mxu0 %v192
    %211 = vmatprep.subr.mxu0 0.0
    %212 = vmatpush1.msra.mxu0 %v193
    %213 = vmatprep.subr.mxu0 0.0
    %214 = vmatpush1.msra.mxu0 %v194
    %215 = vmatprep.subr.mxu0 0.0
    %216 = vmatpush1.msra.mxu0 %v195
    %217 = vmatprep.subr.mxu0 0.0
    %218 = vmatpush1.msra.mxu0 %v196
    %219 = vmatprep.subr.mxu0 0.0
    %220 = vmatpush1.msra.mxu0 %v197
    %221 = vmatprep.subr.mxu0 0.0
    %222 = vmatpush1.msra.mxu0 %v198
    %223 = vmatprep.subr.mxu0 0.0
    %224 = vmatpush1.msra.mxu0 %v199
    %225 = vmatprep.subr.mxu0 0.0
    %226 = vmatpush1.msra.mxu0 %v200
    %227 = vmatprep.subr.mxu0 0.0
    %228 = vmatpush1.msra.mxu0 %v201
    %229 = vmatprep.subr.mxu0 0.0
    %230 = vmatpush1.msra.mxu0 %v202
    %231 = vmatprep.subr.mxu0 0.0
    %232 = vmatpush1.msra.mxu0 %v203
    %233 = vmatprep.subr.mxu0 0.0
    %234 = vmatpush1.msra.mxu0 %v204
    %235 = vmatprep.subr.mxu0 0.0
    %236 = vmatpush1.msra.mxu0 %v205
    %237 = vmatprep.subr.mxu0 0.0
    %238 = vmatpush1.msra.mxu0 %v206
    %239 = vmatprep.subr.mxu0 0.0
    %240 = vmatpush1.msra.mxu0 0.0
    %241 = vmatprep.subr.mxu0 0.0
    %242 = vmatpush1.msra.mxu0 0.0
    %243 = vmatprep.subr.mxu0 0.0
    %244 = vmatpush1.msra.mxu0 0.0
    %245 = vmatprep.subr.mxu0 0.0
    %246 = vmatpush1.msra.mxu0 0.0
    %247 = vmatprep.subr.mxu0 0.0
    %248 = vmatpush1.msra.mxu0 0.0
    %249 = vmatprep.subr.mxu0 0.0
    %250 = vmatpush1.msra.mxu0 0.0
    %251 = vmatprep.subr.mxu0 0.0
    %252 = vmatpush1.msra.mxu0 0.0
    %253 = vmatprep.subr.mxu0 0.0
    %254 = vmatpush1.msra.mxu0 0.0
    %255 = vmatprep.subr.mxu0 0.0
    %256 = vmatpush1.msra.mxu0 0.0
    %257 = vmatprep.subr.mxu0 0.0
    %258 = vmatpush1.msra.mxu0 0.0
    %259 = vmatprep.subr.mxu0 0.0
    %260 = vmatpush1.msra.mxu0 0.0
    %261 = vmatprep.subr.mxu0 0.0
    %262 = vmatpush1.msra.mxu0 0.0
    %263 = vmatprep.subr.mxu0 0.0
    %264 = vmatpush1.msra.mxu0 0.0
    %265 = vmatprep.subr.mxu0 0.0
    %266 = vmatpush1.msra.mxu0 0.0
    %267 = vmatprep.subr.mxu0 0.0
    %268 = vmatpush1.msra.mxu0 0.0
    %269 = vmatprep.subr.mxu0 0.0
    %270 = vmatpush1.msra.mxu0 0.0
    %271 = vmatprep.mubr.f32.mxu0 0.0
    %272 = vmatmul.mubr.f32.gmra.mrb[0].mxu0 %v188
    %v273 = vpop.f32.mrb[0].mxu0
    %v274 = vadd.f32 0.0, %v273
    %v275 = vpop.f32.mrb[0].mxu0
    %276 = vmatprep.mubr.f32.mxu0 0.0
    %277 = vmatmul.mubr.f32.gmra.mrb[0].mxu0 %v189
    %v278 = vpop.f32.mrb[0].mxu0
    %v279 = vadd.f32 0.0, %v278
    %v280 = vpop.f32.mrb[0].mxu0
    %281 = vdwg.mxu0
    %282 = vmatprep.subr.mxu0 0.0
    %283 = vmatpush1.msra.mxu0 %v89
    %284 = vmatprep.subr.mxu0 0.0
    %285 = vmatpush1.msra.mxu0 %v90
    %286 = vmatprep.subr.mxu0 0.0
    %287 = vmatpush1.msra.mxu0 %v91
    %288 = vmatprep.subr.mxu0 0.0
    %289 = vmatpush1.msra.mxu0 %v92
    %290 = vmatprep.subr.mxu0 0.0
    %291 = vmatpush1.msra.mxu0 %v93
    %292 = vmatprep.subr.mxu0 0.0
    %293 = vmatpush1.msra.mxu0 %v94
    %294 = vmatprep.subr.mxu0 0.0
    %295 = vmatpush1.msra.mxu0 %v95
    %296 = vmatprep.subr.mxu0 0.0
    %297 = vmatpush1.msra.mxu0 %v96
    %298 = vmatprep.subr.mxu0 0.0
    %299 = vmatpush1.msra.mxu0 %v97
    %300 = vmatprep.subr.mxu0 0.0
    %301 = vmatpush1.msra.mxu0 %v98
    %302 = vmatprep.subr.mxu0 0.0
    %303 = vmatpush1.msra.mxu0 %v99
    %304 = vmatprep.subr.mxu0 0.0
    %305 = vmatpush1.msra.mxu0 %v100
    %306 = vmatprep.subr.mxu0 0.0
    %307 = vmatpush1.msra.mxu0 %v101
    %308 = vmatprep.subr.mxu0 0.0
    %309 = vmatpush1.msra.mxu0 %v102
    %310 = vmatprep.subr.mxu0 0.0
    %311 = vmatpush1.msra.mxu0 %v103
    %312 = vmatprep.subr.mxu0 0.0
    %313 = vmatpush1.msra.mxu0 %v104
    %314 = vmatprep.subr.mxu0 0.0
    %315 = vmatpush1.msra.mxu0 0.0
    %316 = vmatprep.subr.mxu0 0.0
    %317 = vmatpush1.msra.mxu0 0.0
    %318 = vmatprep.subr.mxu0 0.0
    %319 = vmatpush1.msra.mxu0 0.0
    %320 = vmatprep.subr.mxu0 0.0
    %321 = vmatpush1.msra.mxu0 0.0
    %322 = vmatprep.subr.mxu0 0.0
    %323 = vmatpush1.msra.mxu0 0.0
    %324 = vmatprep.subr.mxu0 0.0
    %325 = vmatpush1.msra.mxu0 0.0
    %326 = vmatprep.subr.mxu0 0.0
    %327 = vmatpush1.msra.mxu0 0.0
    %328 = vmatprep.subr.mxu0 0.0
    %329 = vmatpush1.msra.mxu0 0.0
    %330 = vmatprep.subr.mxu0 0.0
    %331 = vmatpush1.msra.mxu0 0.0
    %332 = vmatprep.subr.mxu0 0.0
    %333 = vmatpush1.msra.mxu0 0.0
    %334 = vmatprep.subr.mxu0 0.0
    %335 = vmatpush1.msra.mxu0 0.0
    %336 = vmatprep.subr.mxu0 0.0
    %337 = vmatpush1.msra.mxu0 0.0
    %338 = vmatprep.subr.mxu0 0.0
    %339 = vmatpush1.msra.mxu0 0.0
    %340 = vmatprep.subr.mxu0 0.0
    %341 = vmatpush1.msra.mxu0 0.0
    %342 = vmatprep.subr.mxu0 0.0
    %343 = vmatpush1.msra.mxu0 0.0
    %344 = vmatprep.subr.mxu0 0.0
    %345 = vmatpush1.msra.mxu0 0.0
    %346 = vmatprep.mubr.f32.mxu0 0.0
    %347 = vmatmul.mubr.f32.gmra.mrb[0].mxu0 %v85
    %v348 = vpop.f32.mrb[0].mxu0
    %v349 = vadd.f32 %v274, %v348
    %v350 = vpop.f32.mrb[0].mxu0
    %351 = vmatprep.mubr.f32.mxu0 0.0
    %352 = vmatmul.mubr.f32.gmra.mrb[0].mxu0 %v86
    %v353 = vpop.f32.mrb[0].mxu0
    %v354 = vadd.f32 %v279, %v353
    %v355 = vpop.f32.mrb[0].mxu0
    %356 = vdwg.mxu0
    %v357 = vld [vmem:[%s3] sm:$0x1]
    %v359 = vlaneseq
    %v360 = vshrl.u32 %v359, 7
    %v361 = vsub.s32 0, %v360
    %v362 = vrot.slane %v357, %v361
    %v364 = vadd.f32 %v349, %v362
    %v365 = vadd.f32 %v354, %v362
    %366 = vst [vmem:[#allocation8] sm:$0xff] %v364
    %367 = vst [vmem:[#allocation8 + $0x8] sm:$0xff] %v365
    // Predicated region
    $region30: #{tpu_custom_call.1} parent=1 // pred_check
      _
    $region31: #{tpu_custom_call.1} parent=1 // pred_check_branch
      %369 = sbr.rel (0) target = $region33
    $region32: #{tpu_custom_call.1} parent=1 // pred_region
      %s371 = ssub.s32 256, 256
      %372 = vsyncadd [#allocation4], %s371
      %s373 = sshll.u32 [#allocation8], 4
      %s374 = int_to_ptr.vmem [resolvable:$true] %s373
      %379 = dma.vmem_to_hbm [thread:$0]  %s374, 256, %s4, [#allocation4], 128, 128, 8
    $region33: #{tpu_custom_call.1} parent=1 // pred_fallthru
      _
    // Predicated region
    $region34: #{tpu_custom_call.1} parent=1 // pred_check
      _
    $region35: #{tpu_custom_call.1} parent=1 // pred_check_branch
      %381 = sbr.rel (0) target = $region37
    $region36: #{tpu_custom_call.1} parent=1 // pred_region
      %382 = dma.done [#allocation4], 256
    $region37: #{tpu_custom_call.1} parent=1 // pred_fallthru
      _
    %383 = vsyncpa [#allocation3], 1
    %384 = vsyncpa [#allocation6], 1
    %385 = vsyncpa [#allocation4], 1

</llo_original>
